<compile_context>
chip_gen: v7x
topology: tpu7x:2x2x1
jax: 0.10.0
libtpu: 0.0.40
codegen_flags: <defaults>
</compile_context>

<pallas_src>
import functools

import jax
import jax.numpy as jnp
from jax.experimental import pallas as pl
from jax.experimental.pallas import tpu as pltpu

_EPS = 1e-8            # matches torch F.cosine_similarity default eps
_EPS_SQ = _EPS * _EPS  # clamp applied to squared norms (exact-equivalent form)


def _similarity_selection_kernel(og_ref, enh_ref, w_ref, b_ref, out_ref, *, num_samples):
    f32 = jnp.float32
    og = og_ref[...].astype(f32)                                          # (B, H)
    S = num_samples
    B = og.shape[0]
    inv_mean = 1.0 / S

    # Hoisted: OG squared norms and their clamped inverse sqrt (one EUP rsqrt, reused S times).
    og_sq = jnp.sum(og * og, axis=-1, keepdims=True)                      # (B, 1)
    inv_og = jax.lax.rsqrt(jnp.maximum(og_sq, _EPS_SQ))                   # (B, 1)

    # Weighted mean over S, accumulated in a single pass over each (B, H) sample tile.
    rep = jnp.zeros(og.shape, dtype=f32)                                  # (B, H)
    for s in range(S):                                                    # static unroll, sublane-aligned slices
        e = enh_ref[s * B:(s + 1) * B, :].astype(f32)                     # (B, H)
        dots = jnp.sum(e * og, axis=-1, keepdims=True)                    # (B, 1)
        e_sq = jnp.sum(e * e, axis=-1, keepdims=True)                     # (B, 1)
        inv_e = jax.lax.rsqrt(jnp.maximum(e_sq, _EPS_SQ))                 # (B, 1)
        # cos(e_b, og_b) / S : fold the mean's 1/S into the per-row weight (free, same mul chain).
        w_row = dots * (inv_e * inv_og * inv_mean)                        # (B, 1)
        rep = rep + e * w_row                                             # (B, H)

    # --- mapping layer: Linear(H, H), weight kept in native torch (out, in) layout ---------
    w = w_ref[...].astype(f32)                                            # (H, H)
    out = jax.lax.dot_general(
        rep, w,
        dimension_numbers=(((1,), (1,)), ((), ())),                       # y = x @ W.T
        preferred_element_type=jnp.float32)
    out_ref[...] = out + b_ref[...].astype(f32)                           # (B, H)


def similarity_selection(og_logits, enhanced_logits, weight, bias):
    """og_logits: (B, H); enhanced_logits: (S, B, H); weight: (H, H) torch-style (out, in); bias: (H,)."""
    S, B, H = enhanced_logits.shape
    enh_flat = enhanced_logits.reshape(S * B, H)   # free bitcast: dense (S*B, H) slab
    bias2d = bias.reshape(1, H)                    # free bitcast

    kernel = functools.partial(_similarity_selection_kernel, num_samples=S)
    return pl.pallas_call(
        kernel,
        out_shape=jax.ShapeDtypeStruct((B, H), jnp.float32),
        in_specs=[
            pl.BlockSpec(memory_space=pltpu.MemorySpace.VMEM),  # OG        (B, H)
            pl.BlockSpec(memory_space=pltpu.MemorySpace.VMEM),  # enhanced  (S*B, H)
            pl.BlockSpec(memory_space=pltpu.MemorySpace.VMEM),  # W         (H, H) native (out, in)
            pl.BlockSpec(memory_space=pltpu.MemorySpace.VMEM),  # bias      (1, H)
        ],
        out_specs=pl.BlockSpec(memory_space=pltpu.MemorySpace.VMEM),
    )(og_logits, enh_flat, weight, bias2d)


def _reference(og, enh, weight, bias):
    """Pure-JAX reference mirroring the PyTorch forward literally."""
    S, B, H = enh.shape
    x = enh.reshape(-1, H)                                                # (S*B, H)
    xn = x / jnp.maximum(jnp.linalg.norm(x, axis=-1, keepdims=True), _EPS)
    on = og / jnp.maximum(jnp.linalg.norm(og, axis=-1, keepdims=True), _EPS)
    sims = (xn @ on.T).reshape(S, B, B)                                   # pairwise cosine
    sims = (sims * jnp.eye(B)).sum(-1)                                    # (S, B) diagonal
    x = x * sims.reshape(-1, 1)
    rep = x.reshape(S, B, H).mean(0)                                      # (B, H)
    return rep @ weight.T + bias


if __name__ == "__main__":
    S, B, H = 4, 8, 128  # small shapes consistent with (S, B, H) logits

    key = jax.random.PRNGKey(0)
    k1, k2, k3, k4 = jax.random.split(key, 4)
    og_logits = jax.random.normal(k1, (B, H), dtype=jnp.float32)
    enhanced_logits = jax.random.normal(k2, (S, B, H), dtype=jnp.float32)
    # Deterministic mapping-layer parameters (nn.Linear(H, H)): W (out, in), bias (out,)
    weight = jax.random.normal(k3, (H, H), dtype=jnp.float32) * (1.0 / jnp.sqrt(H))
    bias = jax.random.normal(k4, (H,), dtype=jnp.float32) * 0.01

    out = similarity_selection(og_logits, enhanced_logits, weight, bias)
    out = jax.block_until_ready(out)

    ref = _reference(og_logits, enhanced_logits, weight, bias)
    assert out.shape == (B, H)
    assert jnp.allclose(out, ref, atol=1e-4, rtol=1e-4), "mismatch vs reference"

    print("KERNEL_OK")
</pallas_src>

<mosaic_0001>
module attributes {stable_mosaic.version = 11 : i64} {
  func.func @_similarity_selection_kernel(%arg0: memref<8x128xf32, #tpu.memory_space<vmem>>, %arg1: memref<32x128xf32, #tpu.memory_space<vmem>>, %arg2: memref<128x128xf32, #tpu.memory_space<vmem>>, %arg3: memref<1x128xf32, #tpu.memory_space<vmem>>, %arg4: memref<8x128xf32, #tpu.memory_space<vmem>>) attributes {dimension_semantics = [], scalar_prefetch = 0 : i64, scratch_operands = 0 : i64, tpu.core_type = #tpu.core_type<tc>} {
    %c0 = arith.constant 0 : index
    %c0_0 = arith.constant 0 : index
    %0 = vector.load %arg0[%c0, %c0_0] : memref<8x128xf32, #tpu.memory_space<vmem>>, vector<8x128xf32>
    %1 = arith.mulf %0, %0 : vector<8x128xf32>
    %cst = arith.constant dense<0.000000e+00> : vector<8xf32>
    %2 = vector.multi_reduction <add>, %1, %cst [1] : vector<8x128xf32> to vector<8xf32>
    %3 = vector.shape_cast %2 : vector<8xf32> to vector<8x1xf32>
    %cst_1 = arith.constant 1.000000e-16 : f32
    %4 = vector.broadcast %cst_1 : f32 to vector<8x1xf32>
    %5 = arith.maximumf %3, %4 : vector<8x1xf32>
    %6 = math.rsqrt %5 : vector<8x1xf32>
    %cst_2 = arith.constant 0.000000e+00 : f32
    %7 = vector.broadcast %cst_2 : f32 to vector<8x128xf32>
    %c0_3 = arith.constant 0 : index
    %c0_4 = arith.constant 0 : index
    %8 = vector.load %arg1[%c0_3, %c0_4] : memref<32x128xf32, #tpu.memory_space<vmem>>, vector<8x128xf32>
    %9 = arith.mulf %8, %0 : vector<8x128xf32>
    %cst_5 = arith.constant dense<0.000000e+00> : vector<8xf32>
    %10 = vector.multi_reduction <add>, %9, %cst_5 [1] : vector<8x128xf32> to vector<8xf32>
    %11 = vector.shape_cast %10 : vector<8xf32> to vector<8x1xf32>
    %12 = arith.mulf %8, %8 : vector<8x128xf32>
    %cst_6 = arith.constant dense<0.000000e+00> : vector<8xf32>
    %13 = vector.multi_reduction <add>, %12, %cst_6 [1] : vector<8x128xf32> to vector<8xf32>
    %14 = vector.shape_cast %13 : vector<8xf32> to vector<8x1xf32>
    %cst_7 = arith.constant 1.000000e-16 : f32
    %15 = vector.broadcast %cst_7 : f32 to vector<8x1xf32>
    %16 = arith.maximumf %14, %15 : vector<8x1xf32>
    %17 = math.rsqrt %16 : vector<8x1xf32>
    %18 = arith.mulf %17, %6 : vector<8x1xf32>
    %cst_8 = arith.constant 2.500000e-01 : f32
    %19 = vector.broadcast %cst_8 : f32 to vector<8x1xf32>
    %20 = arith.mulf %18, %19 : vector<8x1xf32>
    %21 = arith.mulf %11, %20 : vector<8x1xf32>
    %22 = vector.broadcast %21 : vector<8x1xf32> to vector<8x128xf32>
    %23 = arith.mulf %8, %22 : vector<8x128xf32>
    %24 = arith.addf %7, %23 : vector<8x128xf32>
    %c8 = arith.constant 8 : index
    %c0_9 = arith.constant 0 : index
    %25 = vector.load %arg1[%c8, %c0_9] : memref<32x128xf32, #tpu.memory_space<vmem>>, vector<8x128xf32>
    %26 = arith.mulf %25, %0 : vector<8x128xf32>
    %cst_10 = arith.constant dense<0.000000e+00> : vector<8xf32>
    %27 = vector.multi_reduction <add>, %26, %cst_10 [1] : vector<8x128xf32> to vector<8xf32>
    %28 = vector.shape_cast %27 : vector<8xf32> to vector<8x1xf32>
    %29 = arith.mulf %25, %25 : vector<8x128xf32>
    %cst_11 = arith.constant dense<0.000000e+00> : vector<8xf32>
    %30 = vector.multi_reduction <add>, %29, %cst_11 [1] : vector<8x128xf32> to vector<8xf32>
    %31 = vector.shape_cast %30 : vector<8xf32> to vector<8x1xf32>
    %cst_12 = arith.constant 1.000000e-16 : f32
    %32 = vector.broadcast %cst_12 : f32 to vector<8x1xf32>
    %33 = arith.maximumf %31, %32 : vector<8x1xf32>
    %34 = math.rsqrt %33 : vector<8x1xf32>
    %35 = arith.mulf %34, %6 : vector<8x1xf32>
    %cst_13 = arith.constant 2.500000e-01 : f32
    %36 = vector.broadcast %cst_13 : f32 to vector<8x1xf32>
    %37 = arith.mulf %35, %36 : vector<8x1xf32>
    %38 = arith.mulf %28, %37 : vector<8x1xf32>
    %39 = vector.broadcast %38 : vector<8x1xf32> to vector<8x128xf32>
    %40 = arith.mulf %25, %39 : vector<8x128xf32>
    %41 = arith.addf %24, %40 : vector<8x128xf32>
    %c16 = arith.constant 16 : index
    %c0_14 = arith.constant 0 : index
    %42 = vector.load %arg1[%c16, %c0_14] : memref<32x128xf32, #tpu.memory_space<vmem>>, vector<8x128xf32>
    %43 = arith.mulf %42, %0 : vector<8x128xf32>
    %cst_15 = arith.constant dense<0.000000e+00> : vector<8xf32>
    %44 = vector.multi_reduction <add>, %43, %cst_15 [1] : vector<8x128xf32> to vector<8xf32>
    %45 = vector.shape_cast %44 : vector<8xf32> to vector<8x1xf32>
    %46 = arith.mulf %42, %42 : vector<8x128xf32>
    %cst_16 = arith.constant dense<0.000000e+00> : vector<8xf32>
    %47 = vector.multi_reduction <add>, %46, %cst_16 [1] : vector<8x128xf32> to vector<8xf32>
    %48 = vector.shape_cast %47 : vector<8xf32> to vector<8x1xf32>
    %cst_17 = arith.constant 1.000000e-16 : f32
    %49 = vector.broadcast %cst_17 : f32 to vector<8x1xf32>
    %50 = arith.maximumf %48, %49 : vector<8x1xf32>
    %51 = math.rsqrt %50 : vector<8x1xf32>
    %52 = arith.mulf %51, %6 : vector<8x1xf32>
    %cst_18 = arith.constant 2.500000e-01 : f32
    %53 = vector.broadcast %cst_18 : f32 to vector<8x1xf32>
    %54 = arith.mulf %52, %53 : vector<8x1xf32>
    %55 = arith.mulf %45, %54 : vector<8x1xf32>
    %56 = vector.broadcast %55 : vector<8x1xf32> to vector<8x128xf32>
    %57 = arith.mulf %42, %56 : vector<8x128xf32>
    %58 = arith.addf %41, %57 : vector<8x128xf32>
    %c24 = arith.constant 24 : index
    %c0_19 = arith.constant 0 : index
    %59 = vector.load %arg1[%c24, %c0_19] : memref<32x128xf32, #tpu.memory_space<vmem>>, vector<8x128xf32>
    %60 = arith.mulf %59, %0 : vector<8x128xf32>
    %cst_20 = arith.constant dense<0.000000e+00> : vector<8xf32>
    %61 = vector.multi_reduction <add>, %60, %cst_20 [1] : vector<8x128xf32> to vector<8xf32>
    %62 = vector.shape_cast %61 : vector<8xf32> to vector<8x1xf32>
    %63 = arith.mulf %59, %59 : vector<8x128xf32>
    %cst_21 = arith.constant dense<0.000000e+00> : vector<8xf32>
    %64 = vector.multi_reduction <add>, %63, %cst_21 [1] : vector<8x128xf32> to vector<8xf32>
    %65 = vector.shape_cast %64 : vector<8xf32> to vector<8x1xf32>
    %cst_22 = arith.constant 1.000000e-16 : f32
    %66 = vector.broadcast %cst_22 : f32 to vector<8x1xf32>
    %67 = arith.maximumf %65, %66 : vector<8x1xf32>
    %68 = math.rsqrt %67 : vector<8x1xf32>
    %69 = arith.mulf %68, %6 : vector<8x1xf32>
    %cst_23 = arith.constant 2.500000e-01 : f32
    %70 = vector.broadcast %cst_23 : f32 to vector<8x1xf32>
    %71 = arith.mulf %69, %70 : vector<8x1xf32>
    %72 = arith.mulf %62, %71 : vector<8x1xf32>
    %73 = vector.broadcast %72 : vector<8x1xf32> to vector<8x128xf32>
    %74 = arith.mulf %59, %73 : vector<8x128xf32>
    %75 = arith.addf %58, %74 : vector<8x128xf32>
    %c0_24 = arith.constant 0 : index
    %c0_25 = arith.constant 0 : index
    %76 = vector.load %arg2[%c0_24, %c0_25] : memref<128x128xf32, #tpu.memory_space<vmem>>, vector<128x128xf32>
    %cst_26 = arith.constant dense<0.000000e+00> : vector<8x128xf32>
    %77 = tpu.matmul %75, %76, %cst_26 {dimension_numbers = #tpu.dot_dimension_numbers<[1], [1], [0], [0], [0, 0, 1, 0], [], []>} : vector<8x128xf32>, vector<128x128xf32>, vector<8x128xf32> -> vector<8x128xf32>
    %c0_27 = arith.constant 0 : index
    %c0_28 = arith.constant 0 : index
    %78 = vector.load %arg3[%c0_27, %c0_28] : memref<1x128xf32, #tpu.memory_space<vmem>>, vector<1x128xf32>
    %79 = vector.broadcast %78 : vector<1x128xf32> to vector<8x128xf32>
    %80 = arith.addf %77, %79 : vector<8x128xf32>
    %c0_29 = arith.constant 0 : index
    %c0_30 = arith.constant 0 : index
    %81 = vector.load %arg4[%c0_29, %c0_30] : memref<8x128xf32, #tpu.memory_space<vmem>>, vector<8x128xf32>
    tpu.vector_store %arg4[%c0_29, %c0_30], %80 {strides = array<i32>} : memref<8x128xf32, #tpu.memory_space<vmem>>, vector<8x128xf32>,
    return
  }
}

</mosaic_0001>

<llo_original>
// kernel: tpu_custom_call.1
$region0: #{tpu_custom_call.1}
  #allocation0 [shape = 'u32[]', space=smem, size = 0x4, offset = 0x4, fixed_abs, tag = 'smem constant byte address 0x4 - core index']
  #allocation1 [shape = 'u32[144,128]{1,0:T(1,128)}', space=vmem, size = 0x12000, scoped, tag = 'internal scratch']
  %s0 = inlined_call_operand.hbm [shape: f32[8,128], index: 0, kind: input, shape index: {}]
  %s1 = inlined_call_operand.hbm [shape: f32[32,128], index: 1, kind: input, shape index: {}]
  %s2 = inlined_call_operand.hbm [shape: f32[128,128], index: 2, kind: input, shape index: {}]
  %s3 = inlined_call_operand.vmem [shape: f32[1,128], index: 3, kind: input, shape index: {}]
  %s4 = inlined_call_operand.hbm [shape: f32[8,128], index: 4, kind: output, shape index: {}]
  %s5 = sld [smem:[#allocation0]]
  $region38: #{tpu_custom_call.1} parent=0
    _
  %s7 = ssub.s32 1, %s5
  %s8 = scalar_select 0, %s7, %s5
  $region1: #{tpu_custom_call.1} parent=0
    #allocation2 [shape = 'u8[4096]{0}', space=vmem, size = 0x1000, scoped, tag = 'input window, operand 0, single buffered']
    #allocation3 [shape = 's32[1]{0}', space=sflag, size = 0x4, scoped, tag = 'scoped memory for tpu_custom_call.1']
    #allocation4 [shape = 's32[1]{0}', space=sflag, size = 0x4, scoped, tag = 'scoped memory for tpu_custom_call.1']
    #allocation5 [shape = 'u8[16384]{0}', space=vmem, size = 0x4000, scoped, tag = 'input window, operand 1, single buffered']
    #allocation6 [shape = 's32[1]{0}', space=sflag, size = 0x4, scoped, tag = 'scoped memory for tpu_custom_call.1']
    #allocation7 [shape = 'u8[65536]{0}', space=vmem, size = 0x10000, scoped, tag = 'input window, operand 2, single buffered']
    #allocation8 [shape = 'u8[4096]{0}', space=vmem, size = 0x1000, scoped, tag = 'output window, operand 0, single buffered']
    %9 = vsyncpa [#allocation3], 0
    %10 = vsyncpa [#allocation6], 0
    %11 = vsyncpa [#allocation4], 0
    // Predicated region
    $region2: #{tpu_custom_call.1} parent=1 // pred_check
      _
    $region3: #{tpu_custom_call.1} parent=1 // pred_check_branch
      %13 = sbr.rel (0) target = $region5
    $region4: #{tpu_custom_call.1} parent=1 // pred_region
      %s15 = ssub.s32 128, 128
      %16 = vsyncadd [#allocation3], %s15
      %s18 = sshll.u32 [#allocation2], 4
      %s19 = int_to_ptr.vmem [resolvable:$true] %s18
      %21 = dma.hbm_to_vmem [thread:$0]  %s0, 128, %s19, [#allocation3]
    $region5: #{tpu_custom_call.1} parent=1 // pred_fallthru
      _
    // Predicated region
    $region6: #{tpu_custom_call.1} parent=1 // pred_check
      _
    $region7: #{tpu_custom_call.1} parent=1 // pred_check_branch
      %23 = sbr.rel (0) target = $region9
    $region8: #{tpu_custom_call.1} parent=1 // pred_region
      %s25 = ssub.s32 512, 512
      %26 = vsyncadd [#allocation6], %s25
      %s27 = sshll.u32 [#allocation5], 4
      %s28 = int_to_ptr.vmem [resolvable:$true] %s27
      %33 = dma.hbm_to_vmem [thread:$0]  %s1, 512, %s28, [#allocation6], 128, 128, 8
    $region9: #{tpu_custom_call.1} parent=1 // pred_fallthru
      _
    // Predicated region
    $region10: #{tpu_custom_call.1} parent=1 // pred_check
      _
    $region11: #{tpu_custom_call.1} parent=1 // pred_check_branch
      %35 = sbr.rel (0) target = $region13
    $region12: #{tpu_custom_call.1} parent=1 // pred_region
      %s37 = ssub.s32 2048, 2048
      %38 = vsyncadd [#allocation6], %s37
      %s39 = sshll.u32 [#allocation7], 4
      %s40 = int_to_ptr.vmem [resolvable:$true] %s39
      %45 = dma.hbm_to_vmem [thread:$0]  %s2, 2048, %s40, [#allocation6], 128, 128, 8
    $region13: #{tpu_custom_call.1} parent=1 // pred_fallthru
      _
    // Predicated region
    $region14: #{tpu_custom_call.1} parent=1 // pred_check
      _
    $region15: #{tpu_custom_call.1} parent=1 // pred_check_branch
      %47 = sbr.rel (0) target = $region17
    $region16: #{tpu_custom_call.1} parent=1 // pred_region
      _
    $region17: #{tpu_custom_call.1} parent=1 // pred_fallthru
      _
    // Predicated region
    $region18: #{tpu_custom_call.1} parent=1 // pred_check
      _
    $region19: #{tpu_custom_call.1} parent=1 // pred_check_branch
      %49 = sbr.rel (0) target = $region21
    $region20: #{tpu_custom_call.1} parent=1 // pred_region
      %50 = dma.done [#allocation3], 128
    $region21: #{tpu_custom_call.1} parent=1 // pred_fallthru
      _
    // Predicated region
    $region22: #{tpu_custom_call.1} parent=1 // pred_check
      _
    $region23: #{tpu_custom_call.1} parent=1 // pred_check_branch
      %52 = sbr.rel (0) target = $region25
    $region24: #{tpu_custom_call.1} parent=1 // pred_region
      %53 = dma.done [#allocation6], 512
    $region25: #{tpu_custom_call.1} parent=1 // pred_fallthru
      _
    // Predicated region
    $region26: #{tpu_custom_call.1} parent=1 // pred_check
      _
    $region27: #{tpu_custom_call.1} parent=1 // pred_check_branch
      %55 = sbr.rel (0) target = $region29
    $region28: #{tpu_custom_call.1} parent=1 // pred_region
      %56 = dma.done [#allocation6], 2048
    $region29: #{tpu_custom_call.1} parent=1 // pred_fallthru
      _
    %v57 = vld [vmem:[#allocation2] sm:$0xff]
    %v58 = vmul.f32 %v57, %v57
    %59 = vadd.xlane.f32.xlu0 %v58
    %v60 = vpop.xlane.xlu0 %59
    %v61 = vmax.f32 %v60, 1e-16
    %v62 = vrsqrt.pop %v61
    %v63 = vld [vmem:[#allocation5] sm:$0xff]
    %v64 = vmul.f32 %v63, %v57
    %65 = vadd.xlane.f32.xlu0 %v64
    %v66 = vpop.xlane.xlu0 %65
    %v67 = vmul.f32 %v63, %v63
    %68 = vadd.xlane.f32.xlu0 %v67
    %v69 = vpop.xlane.xlu0 %68
    %v70 = vmax.f32 %v69, 1e-16
    %v71 = vrsqrt.pop %v70
    %v72 = vmul.f32 %v71, %v62
    %v73 = vmul.f32 %v72, 0.25
    %v74 = vmul.f32 %v66, %v73
    %v75 = vmul.f32 %v63, %v74
    %v76 = vadd.f32 %v75, 0.0
    %v77 = vld [vmem:[#allocation5 + $0x8] sm:$0xff]
    %v78 = vmul.f32 %v77, %v57
    %79 = vadd.xlane.f32.xlu0 %v78
    %v80 = vpop.xlane.xlu0 %79
    %v81 = vmul.f32 %v77, %v77
    %82 = vadd.xlane.f32.xlu0 %v81
    %v83 = vpop.xlane.xlu0 %82
    %v84 = vmax.f32 %v83, 1e-16
    %v85 = vrsqrt.pop %v84
    %v86 = vmul.f32 %v85, %v62
    %v87 = vmul.f32 %v86, 0.25
    %v88 = vmul.f32 %v80, %v87
    %v89 = vmul.f32 %v77, %v88
    %v90 = vadd.f32 %v76, %v89
    %v91 = vld [vmem:[#allocation5 + $0x10] sm:$0xff]
    %v92 = vmul.f32 %v91, %v57
    %93 = vadd.xlane.f32.xlu0 %v92
    %v94 = vpop.xlane.xlu0 %93
    %v95 = vmul.f32 %v91, %v91
    %96 = vadd.xlane.f32.xlu0 %v95
    %v97 = vpop.xlane.xlu0 %96
    %v98 = vmax.f32 %v97, 1e-16
    %v99 = vrsqrt.pop %v98
    %v100 = vmul.f32 %v99, %v62
    %v101 = vmul.f32 %v100, 0.25
    %v102 = vmul.f32 %v94, %v101
    %v103 = vmul.f32 %v91, %v102
    %v104 = vadd.f32 %v90, %v103
    %v105 = vld [vmem:[#allocation5 + $0x18] sm:$0xff]
    %v106 = vmul.f32 %v105, %v57
    %107 = vadd.xlane.f32.xlu0 %v106
    %v108 = vpop.xlane.xlu0 %107
    %v109 = vmul.f32 %v105, %v105
    %110 = vadd.xlane.f32.xlu0 %v109
    %v111 = vpop.xlane.xlu0 %110
    %v112 = vmax.f32 %v111, 1e-16
    %v113 = vrsqrt.pop %v112
    %v114 = vmul.f32 %v113, %v62
    %v115 = vmul.f32 %v114, 0.25
    %v116 = vmul.f32 %v108, %v115
    %v117 = vmul.f32 %v105, %v116
    %v118 = vadd.f32 %v104, %v117
    %v119 = vld [vmem:[#allocation7] sm:$0xff]
    %v120 = vld [vmem:[#allocation7 + $0x8] sm:$0xff]
    %v121 = vld [vmem:[#allocation7 + $0x10] sm:$0xff]
    %v122 = vld [vmem:[#allocation7 + $0x18] sm:$0xff]
    %v123 = vld [vmem:[#allocation7 + $0x20] sm:$0xff]
    %v124 = vld [vmem:[#allocation7 + $0x28] sm:$0xff]
    %v125 = vld [vmem:[#allocation7 + $0x30] sm:$0xff]
    %v126 = vld [vmem:[#allocation7 + $0x38] sm:$0xff]
    %v127 = vld [vmem:[#allocation7 + $0x40] sm:$0xff]
    %v128 = vld [vmem:[#allocation7 + $0x48] sm:$0xff]
    %v129 = vld [vmem:[#allocation7 + $0x50] sm:$0xff]
    %v130 = vld [vmem:[#allocation7 + $0x58] sm:$0xff]
    %v131 = vld [vmem:[#allocation7 + $0x60] sm:$0xff]
    %v132 = vld [vmem:[#allocation7 + $0x68] sm:$0xff]
    %v133 = vld [vmem:[#allocation7 + $0x70] sm:$0xff]
    %v134 = vld [vmem:[#allocation7 + $0x78] sm:$0xff]
    %v135 = vld [vmem:[%s3] sm:$0x1]
    %v137 = vlaneseq
    %v138 = vshrl.u32 %v137, 7
    %v139 = vsub.s32 0, %v138
    %v140 = vrot.slane %v135, %v139
    %142 = vmatprep.subr.mxu0 0.0
    %143 = vmatpush1.xpose.msra.mxu0 %v119
    %144 = vmatprep.subr.mxu0 0.0
    %145 = vmatpush1.xpose.msra.mxu0 %v120
    %146 = vmatprep.subr.mxu0 0.0
    %147 = vmatpush1.xpose.msra.mxu0 %v121
    %148 = vmatprep.subr.mxu0 0.0
    %149 = vmatpush1.xpose.msra.mxu0 %v122
    %150 = vmatprep.subr.mxu0 0.0
    %151 = vmatpush1.xpose.msra.mxu0 %v123
    %152 = vmatprep.subr.mxu0 0.0
    %153 = vmatpush1.xpose.msra.mxu0 %v124
    %154 = vmatprep.subr.mxu0 0.0
    %155 = vmatpush1.xpose.msra.mxu0 %v125
    %156 = vmatprep.subr.mxu0 0.0
    %157 = vmatpush1.xpose.msra.mxu0 %v126
    %158 = vmatprep.subr.mxu0 0.0
    %159 = vmatpush1.xpose.msra.mxu0 %v127
    %160 = vmatprep.subr.mxu0 0.0
    %161 = vmatpush1.xpose.msra.mxu0 %v128
    %162 = vmatprep.subr.mxu0 0.0
    %163 = vmatpush1.xpose.msra.mxu0 %v129
    %164 = vmatprep.subr.mxu0 0.0
    %165 = vmatpush1.xpose.msra.mxu0 %v130
    %166 = vmatprep.subr.mxu0 0.0
    %167 = vmatpush1.xpose.msra.mxu0 %v131
    %168 = vmatprep.subr.mxu0 0.0
    %169 = vmatpush1.xpose.msra.mxu0 %v132
    %170 = vmatprep.subr.mxu0 0.0
    %171 = vmatpush1.xpose.msra.mxu0 %v133
    %172 = vmatprep.subr.mxu0 0.0
    %173 = vmatpush1.xpose.msra.mxu0 %v134
    %174 = vmatprep.subr.mxu0 0.0
    %175 = vmatpush1.xpose.msra.mxu0 0.0
    %176 = vmatprep.subr.mxu0 0.0
    %177 = vmatpush1.xpose.msra.mxu0 0.0
    %178 = vmatprep.subr.mxu0 0.0
    %179 = vmatpush1.xpose.msra.mxu0 0.0
    %180 = vmatprep.subr.mxu0 0.0
    %181 = vmatpush1.xpose.msra.mxu0 0.0
    %182 = vmatprep.subr.mxu0 0.0
    %183 = vmatpush1.xpose.msra.mxu0 0.0
    %184 = vmatprep.subr.mxu0 0.0
    %185 = vmatpush1.xpose.msra.mxu0 0.0
    %186 = vmatprep.subr.mxu0 0.0
    %187 = vmatpush1.xpose.msra.mxu0 0.0
    %188 = vmatprep.subr.mxu0 0.0
    %189 = vmatpush1.xpose.msra.mxu0 0.0
    %190 = vmatprep.subr.mxu0 0.0
    %191 = vmatpush1.xpose.msra.mxu0 0.0
    %192 = vmatprep.subr.mxu0 0.0
    %193 = vmatpush1.xpose.msra.mxu0 0.0
    %194 = vmatprep.subr.mxu0 0.0
    %195 = vmatpush1.xpose.msra.mxu0 0.0
    %196 = vmatprep.subr.mxu0 0.0
    %197 = vmatpush1.xpose.msra.mxu0 0.0
    %198 = vmatprep.subr.mxu0 0.0
    %199 = vmatpush1.xpose.msra.mxu0 0.0
    %200 = vmatprep.subr.mxu0 0.0
    %201 = vmatpush1.xpose.msra.mxu0 0.0
    %202 = vmatprep.subr.mxu0 0.0
    %203 = vmatpush1.xpose.msra.mxu0 0.0
    %204 = vmatprep.subr.mxu0 0.0
    %205 = vmatpush1.xpose.msra.mxu0 0.0
    %206 = vmatprep.mubr.f32.mxu0 0.0
    %207 = vmatmul.mubr.f32.gmra.mrb[0].mxu0 %v118
    %v208 = vpop.f32.mrb[0].mxu0
    %v209 = vadd.f32 %v140, %v208
    %v210 = vpop.f32.mrb[0].mxu0
    %211 = vdwg.mxu0
    %212 = vst [vmem:[#allocation8] sm:$0xff] %v209
    // Predicated region
    $region30: #{tpu_custom_call.1} parent=1 // pred_check
      _
    $region31: #{tpu_custom_call.1} parent=1 // pred_check_branch
      %214 = sbr.rel (0) target = $region33
    $region32: #{tpu_custom_call.1} parent=1 // pred_region
      %s216 = ssub.s32 128, 128
      %217 = vsyncadd [#allocation4], %s216
      %s219 = sshll.u32 [#allocation8], 4
      %s220 = int_to_ptr.vmem [resolvable:$true] %s219
      %222 = dma.vmem_to_hbm [thread:$0]  %s220, 128, %s4, [#allocation4]
    $region33: #{tpu_custom_call.1} parent=1 // pred_fallthru
      _
    // Predicated region
    $region34: #{tpu_custom_call.1} parent=1 // pred_check
      _
    $region35: #{tpu_custom_call.1} parent=1 // pred_check_branch
      %224 = sbr.rel (0) target = $region37
    $region36: #{tpu_custom_call.1} parent=1 // pred_region
      %225 = dma.done [#allocation4], 128
    $region37: #{tpu_custom_call.1} parent=1 // pred_fallthru
      _
    %226 = vsyncpa [#allocation3], 1
    %227 = vsyncpa [#allocation6], 1
    %228 = vsyncpa [#allocation4], 1

</llo_original>
